<compile_context>
chip_gen: v5e
topology: v5e:2x2
jax: 0.10.0
libtpu: 0.0.40
codegen_flags: <defaults>
</compile_context>

<pallas_src>
import functools

import jax
import jax.numpy as jnp
from jax.experimental import pallas as pl
from jax.experimental.pallas import tpu as pltpu


def _round_up(x, m):
    return ((x + m - 1) // m) * m


def _round_down(x, m):
    return (x // m) * m


def _vmem_capacity_bytes():
    """Per-TensorCore VMEM capacity, with a conservative (v7x) fallback."""
    try:
        cap = int(pltpu.get_tpu_info().vmem_capacity_bytes)
        # Clamp to sane per-TC bounds (64 MiB on v7x .. 128 MiB on v5e/v6e).
        return max(64 * 1024 * 1024, min(cap, 128 * 1024 * 1024))
    except Exception:
        return 64 * 1024 * 1024


def _fused_prediction_kernel(x_ref, w_ref, o_ref, *, compute_dtype):
    # x_ref: (TM, D)   w_ref: (D, TN)   o_ref: (TM, TN)
    x = x_ref[...]
    w = w_ref[...]
    if compute_dtype is not None:
        # In-kernel cast (rides the VPU slot, hidden under the MXU); inputs
        # stay f32 in HBM so no extra wrapper cast pass is paid.
        x = x.astype(compute_dtype)
        w = w.astype(compute_dtype)
    o_ref[...] = jnp.dot(x, w, preferred_element_type=jnp.float32).astype(o_ref.dtype)


def prepare_weights(weights):
    """weights: (K, E, D) in PyTorch nn.Linear layout -> W_cat: (D, E*K).

    Column index = e*K + k, so  (x @ W_cat).reshape(B, S, E, K)  is already in
    the PyTorch output layout (the transpose is folded into the weights).
    Done once; weights are static across forward calls.
    """
    K, E, D = weights.shape
    return jnp.transpose(weights, (2, 1, 0)).reshape(D, E * K)


@functools.partial(
    jax.jit, static_argnames=("n_predicts", "block_m", "use_bf16", "out_dtype")
)
def prediction_network_forward(c, w_cat, n_predicts, *, block_m=512,
                               use_bf16=False, out_dtype=None):
    """c: (B, S, D); w_cat: (D, E*K) from prepare_weights.

    Returns (B, S, E, K), matching PredictionNetwork.forward with
    rnnMode=None and dropout disabled.
    """
    B, S, D = c.shape
    D2, KE = w_cat.shape
    assert D == D2
    K = n_predicts
    assert KE % K == 0
    E = KE // K
    M = B * S

    out_dtype = c.dtype if out_dtype is None else out_dtype
    compute_dtype = jnp.bfloat16 if use_bf16 else None

    x_bytes = jnp.dtype(c.dtype).itemsize        # VMEM tile dtype (cast in-kernel)
    w_bytes = jnp.dtype(w_cat.dtype).itemsize
    out_bytes = jnp.dtype(out_dtype).itemsize

    # ---- VMEM-aware tile sizing (budget per TensorCore) --------------------
    cap = _vmem_capacity_bytes()
    budget = int(cap * 0.65)        # what our double-buffered tiles may use
    vmem_limit = int(cap * 0.85)    # Mosaic scoped-VMEM limit (above defaults)

    # Sublane packing: 16-row multiples for 16-bit output tiles, else 8.
    m_mult = 16 if (use_bf16 or out_bytes == 2) else 8

    # Column tiling: keep W fully resident for modest E*K; otherwise tile the
    # output columns (lane-dense, multiple of 128) so VMEM is bounded
    # independently of E*K.
    if KE <= 2048 or 2 * D * KE * w_bytes <= budget // 3:
        tn = KE
    else:
        tn = 2048
        while tn > 128 and 2 * D * tn * w_bytes > budget // 2:
            tn //= 2
    nc = pl.cdiv(KE, tn)

    # Row tiling: largest tm such that double-buffered x/out tiles plus the
    # (double-buffered) W column block fit the budget, capped at block_m.
    w_block_bytes = 2 * D * tn * w_bytes
    per_row_bytes = 2 * (D * x_bytes + tn * out_bytes)
    tm_fit = max((budget - w_block_bytes) // per_row_bytes, m_mult)
    tm = min(block_m, tm_fit, _round_up(M, m_mult))
    tm = max(_round_down(tm, m_mult), m_mult)
    nm = pl.cdiv(M, tm)

    x = c.reshape(M, D)             # no pad: Pallas clips the boundary block

    cost = pl.CostEstimate(
        flops=2 * M * D * KE,
        transcendentals=0,
        # x re-read once per column block; W read once; output written once.
        bytes_accessed=nc * M * D * x_bytes + D * KE * w_bytes + M * KE * out_bytes,
    )

    kernel = functools.partial(_fused_prediction_kernel, compute_dtype=compute_dtype)

    out = pl.pallas_call(
        kernel,
        out_shape=jax.ShapeDtypeStruct((M, KE), out_dtype),
        grid_spec=pltpu.PrefetchScalarGridSpec(
            num_scalar_prefetch=0,
            # Column axis OUTERMOST: each W column block is DMA'd once and
            # reused across every M tile of the inner axis.
            grid=(nc, nm),
            in_specs=[
                pl.BlockSpec((tm, D), lambda n, i: (i, 0)),   # x tile
                pl.BlockSpec((D, tn), lambda n, i: (0, n)),   # W column block
            ],
            out_specs=pl.BlockSpec((tm, tn), lambda n, i: (i, n)),
        ),
        compiler_params=pltpu.CompilerParams(
            dimension_semantics=("parallel", "parallel"),
            vmem_limit_bytes=vmem_limit,
        ),
        cost_estimate=cost,
    )(x, w_cat)                                   # (M, E*K), columns = e*K + k

    # Metadata-only reshape straight into the PyTorch (B, S, E, K) layout.
    return out.reshape(B, S, E, K)


def init_weights(key, n_predicts, dim_ar, dim_enc):
    """Deterministic synthetic init mirroring the PyTorch __init__ logic."""
    ws = []
    for _ in range(n_predicts):
        key, k1, k2 = jax.random.split(key, 3)
        if dim_enc > dim_ar:
            top = jax.random.normal(k1, (dim_ar, dim_ar), dtype=jnp.float32)
            residual = dim_enc - dim_ar
            bot = 0.01 * jax.random.normal(k2, (residual, dim_ar),
                                           dtype=jnp.float32)
            w = jnp.concatenate([top, bot], axis=0)          # (E, D)
        else:
            bound = 1.0 / jnp.sqrt(dim_ar)
            w = jax.random.uniform(k1, (dim_enc, dim_ar), minval=-bound,
                                   maxval=bound, dtype=jnp.float32)
        ws.append(w)
    return jnp.stack(ws, axis=0)              # (K, E, D)


if __name__ == "__main__":
    # Small shapes consistent with the module's forward.
    B, S = 2, 8            # batch, sequence length
    dimOutputAR = 32       # D
    dimOutputEncoder = 64  # E  (> D to exercise the residual-init branch)
    nPredicts = 4          # K  (E*K = 256 -> lane-dense, 128-multiple output)

    key = jax.random.PRNGKey(0)
    kc, kw = jax.random.split(key)
    c = jax.random.normal(kc, (B, S, dimOutputAR), dtype=jnp.float32)
    weights = init_weights(kw, nPredicts, dimOutputAR, dimOutputEncoder)

    # Static weight prep (done once, outside the per-call path).
    w_cat = prepare_weights(weights)          # (D, E*K), columns = e*K + k

    # Reference in plain JAX: out[..., k] = c @ W_k^T  -> (B, S, E, K).
    ref = jnp.stack([c @ weights[k].T for k in range(nPredicts)], axis=-1)

    # f32 path: matches PyTorch numerics.
    out = prediction_network_forward(c, w_cat, nPredicts)
    out = jax.block_until_ready(out)
    assert out.shape == (B, S, dimOutputEncoder, nPredicts)
    assert jnp.allclose(out, ref, atol=1e-5, rtol=1e-5)

    # bf16 compute path (in-kernel cast, bf16 writeback): looser tolerance —
    # expected, since bf16 mantissa is ~8 bits.
    out_bf16 = prediction_network_forward(c, w_cat, nPredicts,
                                          use_bf16=True,
                                          out_dtype=jnp.bfloat16)
    out_bf16 = jax.block_until_ready(out_bf16)
    assert out_bf16.shape == (B, S, dimOutputEncoder, nPredicts)
    assert jnp.allclose(out_bf16.astype(jnp.float32), ref, atol=0.5, rtol=0.1)

    print("KERNEL_OK")
</pallas_src>

<mosaic_0001>
module attributes {stable_mosaic.version = 11 : i64} {
  func.func @_fused_prediction_kernel(%arg0: i32, %arg1: i32, %arg2: memref<16x32xf32, #tpu.memory_space<vmem>>, %arg3: memref<32x256xf32, #tpu.memory_space<vmem>>, %arg4: memref<16x256xf32, #tpu.memory_space<vmem>>) attributes {dimension_semantics = [#tpu.dimension_semantics<parallel>, #tpu.dimension_semantics<parallel>], iteration_bounds = array<i64: 1, 1>, scalar_prefetch = 0 : i64, scratch_operands = 0 : i64, tpu.core_type = #tpu.core_type<tc>, window_params = [{transform_indices = @transform_0, window_bounds = array<i64: 16, 32>}, {transform_indices = @transform_1, window_bounds = array<i64: 32, 256>}, {transform_indices = @transform_2, window_bounds = array<i64: 16, 256>}]} {
    %c0 = arith.constant 0 : index
    %c0_0 = arith.constant 0 : index
    %0 = vector.load %arg2[%c0, %c0_0] : memref<16x32xf32, #tpu.memory_space<vmem>>, vector<16x32xf32>
    %c0_1 = arith.constant 0 : index
    %c0_2 = arith.constant 0 : index
    %1 = vector.load %arg3[%c0_1, %c0_2] : memref<32x256xf32, #tpu.memory_space<vmem>>, vector<32x256xf32>
    %cst = arith.constant dense<0.000000e+00> : vector<16x256xf32>
    %2 = tpu.matmul %0, %1, %cst {dimension_numbers = #tpu.dot_dimension_numbers<[1], [0], [0], [1], [0, 0, 1, 1], [], []>} : vector<16x32xf32>, vector<32x256xf32>, vector<16x256xf32> -> vector<16x256xf32>
    %c0_3 = arith.constant 0 : index
    %c0_4 = arith.constant 0 : index
    %3 = vector.load %arg4[%c0_3, %c0_4] : memref<16x256xf32, #tpu.memory_space<vmem>>, vector<16x256xf32>
    tpu.vector_store %arg4[%c0_3, %c0_4], %2 {strides = array<i32>} : memref<16x256xf32, #tpu.memory_space<vmem>>, vector<16x256xf32>,
    return
  }
  func.func @transform_0(%arg0: i32, %arg1: i32) -> (i32, i32) {
    %c0_i32 = arith.constant 0 : i32
    %c0_i32_0 = arith.constant 0 : i32
    return %arg1, %c0_i32 : i32, i32
  }
  func.func @transform_1(%arg0: i32, %arg1: i32) -> (i32, i32) {
    %c0_i32 = arith.constant 0 : i32
    %c0_i32_0 = arith.constant 0 : i32
    return %c0_i32, %arg0 : i32, i32
  }
  func.func @transform_2(%arg0: i32, %arg1: i32) -> (i32, i32) {
    %c0_i32 = arith.constant 0 : i32
    return %arg1, %arg0 : i32, i32
  }
}

</mosaic_0001>

<llo_original>
// kernel: prediction_network_forward.1
$region0: #{prediction_network_forward.1}
  #allocation0 [shape = 'u32[]', space=smem, size = 0x4, offset = 0x4, fixed_abs, tag = 'smem constant byte address 0x4 - core index']
  #allocation1 [shape = 'u32[72,128]{1,0:T(1,128)}', space=vmem, size = 0x9000, scoped, tag = 'internal scratch']
  %s0 = inlined_call_operand.hbm [shape: f32[16,32], index: 0, kind: input, shape index: {}]
  %s1 = inlined_call_operand.hbm [shape: f32[32,256], index: 1, kind: input, shape index: {}]
  %s2 = inlined_call_operand.vmem [shape: f32[16,256], index: 2, kind: output, shape index: {}]
  %s3 = sld [smem:[#allocation0]]
  $region26: #{prediction_network_forward.1} parent=0
    _
  %s5 = ssub.s32 1, %s3
  %s6 = scalar_select 0, %s5, %s3
  $region1: #{prediction_network_forward.1} parent=0
    #allocation2 [shape = 'u8[8192]{0}', space=vmem, size = 0x2000, scoped, tag = 'input window, operand 0, single buffered']
    #allocation3 [shape = 's32[1]{0}', space=sflag, size = 0x4, scoped, tag = 'scoped memory for prediction_network_forward.1']
    #allocation4 [shape = 'u8[32768]{0}', space=vmem, size = 0x8000, scoped, tag = 'input window, operand 1, single buffered']
    #allocation5 [shape = 's32[1]{0}', space=sflag, size = 0x4, scoped, tag = 'scoped memory for prediction_network_forward.1']
    %7 = vsyncpa [#allocation3], 0
    %8 = vsyncpa [#allocation5], 0
    // Predicated region
    $region2: #{prediction_network_forward.1} parent=1 // pred_check
      _
    $region3: #{prediction_network_forward.1} parent=1 // pred_check_branch
      %10 = sbr.rel (0) target = $region5
    $region4: #{prediction_network_forward.1} parent=1 // pred_region
      %12 = vsyncadd [#allocation3], 0
      %s13 = sshll.u32 %s0, 4
      %s14 = int_to_ptr.hbm [resolvable:$true] %s13
      %s15 = sshll.u32 [#allocation2], 4
      %s16 = int_to_ptr.vmem [resolvable:$true] %s15
      %21 = dma.hbm_to_vmem [thread:$0]  %s14, 256, %s16, [#allocation3], 128, 128, 8
    $region5: #{prediction_network_forward.1} parent=1 // pred_fallthru
      _
    // Predicated region
    $region6: #{prediction_network_forward.1} parent=1 // pred_check
      _
    $region7: #{prediction_network_forward.1} parent=1 // pred_check_branch
      %23 = sbr.rel (0) target = $region9
    $region8: #{prediction_network_forward.1} parent=1 // pred_region
      %25 = vsyncadd [#allocation5], 0
      %s26 = sshll.u32 %s1, 4
      %s27 = int_to_ptr.hbm [resolvable:$true] %s26
      %s28 = sshll.u32 [#allocation4], 4
      %s29 = int_to_ptr.vmem [resolvable:$true] %s28
      %34 = dma.hbm_to_vmem [thread:$0]  %s27, 1024, %s29, [#allocation5], 256, 256, 16
    $region9: #{prediction_network_forward.1} parent=1 // pred_fallthru
      _
    // Predicated region
    $region10: #{prediction_network_forward.1} parent=1 // pred_check
      _
    $region11: #{prediction_network_forward.1} parent=1 // pred_check_branch
      %36 = sbr.rel (0) target = $region13
    $region12: #{prediction_network_forward.1} parent=1 // pred_region
      %38 = dma.done [#allocation3], 256
    $region13: #{prediction_network_forward.1} parent=1 // pred_fallthru
      _
    // Predicated region
    $region14: #{prediction_network_forward.1} parent=1 // pred_check
      _
    $region15: #{prediction_network_forward.1} parent=1 // pred_check_branch
      %40 = sbr.rel (0) target = $region17
    $region16: #{prediction_network_forward.1} parent=1 // pred_region
      %42 = dma.done [#allocation5], 1024
    $region17: #{prediction_network_forward.1} parent=1 // pred_fallthru
      _
    %v43 = vld [vmem:[#allocation2] sm:$0xff]
    %v44 = vld [vmem:[#allocation2 + $0x8] sm:$0xff]
    %v45 = vld [vmem:[#allocation4] sm:$0xff]
    %v46 = vld [vmem:[#allocation4 + $0x8] sm:$0xff]
    %v47 = vld [vmem:[#allocation4 + $0x10] sm:$0xff]
    %v48 = vld [vmem:[#allocation4 + $0x18] sm:$0xff]
    %v49 = vld [vmem:[#allocation4 + $0x20] sm:$0xff]
    %v50 = vld [vmem:[#allocation4 + $0x28] sm:$0xff]
    %v51 = vld [vmem:[#allocation4 + $0x30] sm:$0xff]
    %v52 = vld [vmem:[#allocation4 + $0x38] sm:$0xff]
    %vm53 = vcmask 261120
    %v55 = vsel %vm53, %v43, 0
    %v58 = vsel %vm53, %v44, 0
    %60 = vmatpush.msra.mxu0 0.0
    %61 = vmatpush.msra.mxu0 0.0
    %62 = vmatpush.msra.mxu0 0.0
    %63 = vmatpush.msra.mxu0 0.0
    %64 = vmatpush.msra.mxu0 0.0
    %65 = vmatpush.msra.mxu0 0.0
    %66 = vmatpush.msra.mxu0 0.0
    %67 = vmatpush.msra.mxu0 0.0
    %68 = vmatpush.msra.mxu0 0.0
    %69 = vmatpush.msra.mxu0 0.0
    %70 = vmatpush.msra.mxu0 0.0
    %71 = vmatpush.msra.mxu0 0.0
    %72 = vmatpush.msra.mxu0 %v51
    %73 = vmatpush.msra.mxu0 %v49
    %74 = vmatpush.msra.mxu0 %v47
    %75 = vmatpush.msra.mxu0 %v45
    %76 = vmatmul.f32.gmra.mxu0 %v55
    %v77 = vpop.f32.mrf.mxu0
    %v78 = vadd.f32 0.0, %v77
    %79 = vmatmul.f32.gmra.mxu0 %v58
    %v80 = vpop.f32.mrf.mxu0
    %v81 = vadd.f32 0.0, %v80
    %82 = vdwg.mxu0
    %83 = vmatpush.msra.mxu0 0.0
    %84 = vmatpush.msra.mxu0 0.0
    %85 = vmatpush.msra.mxu0 0.0
    %86 = vmatpush.msra.mxu0 0.0
    %87 = vmatpush.msra.mxu0 0.0
    %88 = vmatpush.msra.mxu0 0.0
    %89 = vmatpush.msra.mxu0 0.0
    %90 = vmatpush.msra.mxu0 0.0
    %91 = vmatpush.msra.mxu0 0.0
    %92 = vmatpush.msra.mxu0 0.0
    %93 = vmatpush.msra.mxu0 0.0
    %94 = vmatpush.msra.mxu0 0.0
    %95 = vmatpush.msra.mxu0 %v52
    %96 = vmatpush.msra.mxu0 %v50
    %97 = vmatpush.msra.mxu0 %v48
    %98 = vmatpush.msra.mxu0 %v46
    %99 = vmatmul.f32.gmra.mxu0 %v55
    %v100 = vpop.f32.mrf.mxu0
    %v101 = vadd.f32 0.0, %v100
    %102 = vmatmul.f32.gmra.mxu0 %v58
    %v103 = vpop.f32.mrf.mxu0
    %v104 = vadd.f32 0.0, %v103
    %105 = vdwg.mxu0
    %106 = vst [vmem:[%s2] sm:$0xff] %v78
    %107 = vst [vmem:[%s2 + $0x8] sm:$0xff] %v101
    %108 = vst [vmem:[%s2 + $0x10] sm:$0xff] %v81
    %109 = vst [vmem:[%s2 + $0x18] sm:$0xff] %v104
    // Predicated region
    $region18: #{prediction_network_forward.1} parent=1 // pred_check
      _
    $region19: #{prediction_network_forward.1} parent=1 // pred_check_branch
      %111 = sbr.rel (0) target = $region21
    $region20: #{prediction_network_forward.1} parent=1 // pred_region
      _
    $region21: #{prediction_network_forward.1} parent=1 // pred_fallthru
      _
    // Predicated region
    $region22: #{prediction_network_forward.1} parent=1 // pred_check
      _
    $region23: #{prediction_network_forward.1} parent=1 // pred_check_branch
      %113 = sbr.rel (0) target = $region25
    $region24: #{prediction_network_forward.1} parent=1 // pred_region
      _
    $region25: #{prediction_network_forward.1} parent=1 // pred_fallthru
      _
    %114 = vsyncpa [#allocation3], 1
    %115 = vsyncpa [#allocation5], 1

</llo_original>
